<compile_context>
chip_gen: v7x
topology: tpu7x:2x2x1
jax: 0.10.0
libtpu: 0.0.40
codegen_flags: <defaults>
</compile_context>

<pallas_src>
import jax
import jax.numpy as jnp
from jax.experimental import pallas as pl
from jax.experimental.pallas import tpu as pltpu


# ----------------------------------------------------------------------------
# Recommended forward: identical to PyTorch `return self.poisson_parameter`.
# No pallas_call -- the op has zero useful compute.
# ----------------------------------------------------------------------------
def poisson_parameter_forward(poisson_parameter: jax.Array, t=None) -> jax.Array:
    del t  # unused, as in the PyTorch module
    return jnp.asarray(poisson_parameter)


# ----------------------------------------------------------------------------
# Quarantined Pallas fallback: only for when an on-device kernel is mandated.
# Scalar lives in 1-D SMEM on both sides (one sld + one sst, no VMEM tile,
# no masked vector store, no grid).
# ----------------------------------------------------------------------------
def _copy_param_kernel(param_ref, out_ref):
    out_ref[0] = param_ref[0]


def poisson_parameter_forward_pallas(poisson_parameter: jax.Array, t=None) -> jax.Array:
    del t  # unused, as in the PyTorch module
    orig_shape = poisson_parameter.shape
    flat = poisson_parameter.reshape(-1)  # f32[1]; 1-D SMEM avoids 2-D padding
    out_flat = pl.pallas_call(
        _copy_param_kernel,
        out_shape=jax.ShapeDtypeStruct(flat.shape, flat.dtype),
        in_specs=[pl.BlockSpec(memory_space=pltpu.MemorySpace.SMEM)],
        out_specs=pl.BlockSpec(memory_space=pltpu.MemorySpace.SMEM),
    )(flat)
    return out_flat.reshape(orig_shape)


# ----------------------------------------------------------------------------
# Consumer-fusion pattern (the only structurally meaningful speedup, per
# review): a downstream kernel that needs the Poisson rate takes the
# (1,)-flattened parameter as an SMEM input directly -- no standalone copy
# kernel, no extra launch, no HBM round-trip.
# ----------------------------------------------------------------------------
def _scale_by_poisson_kernel(param_smem, x_ref, o_ref):
    # Scalar read from SMEM; broadcast multiply done once over the whole block.
    o_ref[...] = x_ref[...] * param_smem[0]


def scale_by_poisson_parameter(poisson_parameter: jax.Array, x: jax.Array) -> jax.Array:
    """Example consumer: y = x * poisson_parameter (scalar fed via SMEM)."""
    flat = poisson_parameter.reshape(-1)  # f32[1]
    return pl.pallas_call(
        _scale_by_poisson_kernel,
        out_shape=jax.ShapeDtypeStruct(x.shape, x.dtype),
        in_specs=[
            pl.BlockSpec(memory_space=pltpu.MemorySpace.SMEM),  # the scalar
            pl.BlockSpec(memory_space=pltpu.MemorySpace.VMEM),  # full block
        ],
        out_specs=pl.BlockSpec(memory_space=pltpu.MemorySpace.VMEM),
    )(flat, x)


def init_poisson_parameter() -> jax.Array:
    # Deterministic init exactly as in the PyTorch __init__: tensor([[0.5]])
    return jnp.array([[0.5]], dtype=jnp.float32)


if __name__ == "__main__":
    # Deterministic setup; PRNGKey only builds a dummy `t`, which forward
    # ignores (as in PyTorch).
    key = jax.random.PRNGKey(0)
    k_t, k_x = jax.random.split(key)
    t_dummy = jax.random.normal(k_t, (8,), dtype=jnp.float32)

    poisson_parameter = init_poisson_parameter()

    # 1) Fast path (the one real code should use): no kernel launch.
    out_fast = jax.block_until_ready(
        poisson_parameter_forward(poisson_parameter, t=t_dummy)
    )

    # 2) Quarantined Pallas fallback (1-D SMEM passthrough).
    out_kernel = jax.block_until_ready(
        poisson_parameter_forward_pallas(poisson_parameter, t=t_dummy)
    )

    # 3) Consumer-fusion demo: scalar consumed in-place via SMEM by a real kernel.
    x = jax.random.normal(k_x, (8, 128), dtype=jnp.float32)
    y = jax.block_until_ready(scale_by_poisson_parameter(poisson_parameter, x))

    # Correctness checks against the reference semantics.
    assert out_fast.shape == (1, 1) and out_fast.dtype == jnp.float32
    assert out_kernel.shape == (1, 1) and out_kernel.dtype == jnp.float32
    assert float(out_fast[0, 0]) == 0.5
    assert float(out_kernel[0, 0]) == 0.5
    assert y.shape == x.shape
    assert jnp.allclose(y, x * 0.5, rtol=1e-6, atol=1e-6)

    print("KERNEL_OK")
</pallas_src>

<mosaic_0001>
module attributes {stable_mosaic.version = 11 : i64} {
  func.func @_copy_param_kernel(%arg0: memref<1xf32, #tpu.memory_space<smem>>, %arg1: memref<1xf32, #tpu.memory_space<smem>>) attributes {dimension_semantics = [], scalar_prefetch = 0 : i64, scratch_operands = 0 : i64, tpu.core_type = #tpu.core_type<tc>} {
    %c0 = arith.constant 0 : index
    %0 = memref.load %arg0[%c0] : memref<1xf32, #tpu.memory_space<smem>>
    %c0_0 = arith.constant 0 : index
    %1 = memref.load %arg1[%c0_0] : memref<1xf32, #tpu.memory_space<smem>>
    memref.store %0, %arg1[%c0_0] : memref<1xf32, #tpu.memory_space<smem>>
    return
  }
}

</mosaic_0001>

<llo_original>
// kernel: tpu_custom_call.1
$region0: #{tpu_custom_call.1}
  #allocation0 [shape = 'u32[]', space=smem, size = 0x4, offset = 0x4, fixed_abs, tag = 'smem constant byte address 0x4 - core index']
  #allocation1 [shape = 'u32[144,128]{1,0:T(1,128)}', space=vmem, size = 0x12000, scoped, tag = 'internal scratch']
  #allocation2 [shape = 'f32[1]{0:T(128)S(6)}', space=smem, size = 0x200, scoped, tag = 'scoped memory for tpu_custom_call.1']
  %s0 = inlined_call_operand.<no memory space> [shape: f32[1], index: 0, kind: input, shape index: {}]
  %s1 = inlined_call_operand.hbm [shape: f32[1], index: 1, kind: output, shape index: {}]
  %s2 = sld [smem:[#allocation0]]
  $region14: #{tpu_custom_call.1} parent=0
    _
  %s4 = ssub.s32 1, %s2
  %s5 = scalar_select 0, %s4, %s2
  %6 = sst [smem:[#allocation2]] %s0
  $region1: #{tpu_custom_call.1} parent=0
    #allocation3 [shape = 'u8[512]{0}', space=smem, size = 0x200, scoped, tag = 'output window, operand 0, single buffered']
    #allocation4 [shape = 's32[1]{0}', space=sflag, size = 0x4, scoped, tag = 'scoped memory for tpu_custom_call.1']
    %7 = vsyncpa [#allocation4], 0
    // Predicated region
    $region2: #{tpu_custom_call.1} parent=1 // pred_check
      _
    $region3: #{tpu_custom_call.1} parent=1 // pred_check_branch
      %9 = sbr.rel (0) target = $region5
    $region4: #{tpu_custom_call.1} parent=1 // pred_region
      _
    $region5: #{tpu_custom_call.1} parent=1 // pred_fallthru
      _
    %s10 = sld [smem:[#allocation2]]
    %s11 = scalar_lea.smem [#allocation3], 0
    %12 = sst [smem:[%s11]] %s10
    // Predicated region
    $region6: #{tpu_custom_call.1} parent=1 // pred_check
      _
    $region7: #{tpu_custom_call.1} parent=1 // pred_check_branch
      %14 = sbr.rel (0) target = $region9
    $region8: #{tpu_custom_call.1} parent=1 // pred_region
      %s16 = ssub.s32 16, 16
      %17 = vsyncadd [#allocation4], %s16
      %20 = dma.smem_to_hbm [#allocation3], 16, %s1, [#allocation4]
    $region9: #{tpu_custom_call.1} parent=1 // pred_fallthru
      _
    // Predicated region
    $region10: #{tpu_custom_call.1} parent=1 // pred_check
      _
    $region11: #{tpu_custom_call.1} parent=1 // pred_check_branch
      %22 = sbr.rel (0) target = $region13
    $region12: #{tpu_custom_call.1} parent=1 // pred_region
      %23 = dma.done [#allocation4], 16
    $region13: #{tpu_custom_call.1} parent=1 // pred_fallthru
      _
    %24 = sfence
    %25 = vsyncpa [#allocation4], 1

</llo_original>
